<compile_context>
chip_gen: v6e
topology: v6e:2x2x1
jax: 0.10.0
libtpu: 0.0.40
codegen_flags: <defaults>
</compile_context>

<pallas_src>
import jax
import jax.numpy as jnp
from jax.experimental import pallas as pl
from jax.experimental.pallas import tpu as pltpu

_LANE = 128


def _round_up(v, m):
    return ((v + m - 1) // m) * m


def _sublane(dtype):
    # bf16 (2-byte) packs two rows per sublane -> min sublane tile is 16.
    return 16 if jnp.dtype(dtype).itemsize == 2 else 8


# ---------------------------------------------------------------------------
# Kernels
# ---------------------------------------------------------------------------

def slp_kernel_f32out(x_ref, wt_ref, o_ref):
    """Accumulate directly into the f32 output block (no scratch, no zero-init)."""
    k = pl.program_id(2)
    prod = jnp.dot(x_ref[...], wt_ref[...], preferred_element_type=jnp.float32)

    @pl.when(k == 0)
    def _first():
        o_ref[...] = prod

    @pl.when(k > 0)
    def _accum():
        o_ref[...] += prod


def slp_kernel_scratch(x_ref, wt_ref, o_ref, acc_ref):
    """f32 VMEM accumulator variant for non-f32 output dtypes."""
    k = pl.program_id(2)
    prod = jnp.dot(x_ref[...], wt_ref[...], preferred_element_type=jnp.float32)

    @pl.when(k == 0)
    def _first():
        acc_ref[...] = prod

    @pl.when(k > 0)
    def _accum():
        acc_ref[...] += prod

    @pl.when(k == pl.num_programs(2) - 1)
    def _store():
        o_ref[...] = acc_ref[...].astype(o_ref.dtype)


# ---------------------------------------------------------------------------
# Wrapper
# ---------------------------------------------------------------------------

def _choose_kn_tiles(input_size, output_size):
    """Pick (tk, tn) and padded (Kp, Np) for the weight layout (K, N)=(IN, OUT)."""
    kp_min = _round_up(input_size, _LANE)
    np_min = _round_up(output_size, _LANE)

    tk = min(1024, kp_min)

    if np_min >= 2 * _LANE:
        # Keep >= 2 N blocks so a v7x megacore can shard the parallel N axis.
        tn = min(512, _round_up(np_min // 2, _LANE))
    else:
        tn = np_min

    kp = _round_up(kp_min, tk)
    np_ = _round_up(np_min, tn)
    return tk, tn, kp, np_


def prepare_weight(weight, *, compute_dtype=jnp.bfloat16):
    """Transpose + cast + pad the nn.Linear weight (OUT, IN) -> (Kp, Np) ONCE.

    Call this at module init (or under jit so it is cached); it keeps the per-call
    path free of the extra full-weight HBM traffic the transpose/pad would cost.
    """
    output_size, input_size = weight.shape
    tk, tn, kp, np_ = _choose_kn_tiles(input_size, output_size)

    wt = jnp.transpose(weight).astype(compute_dtype)  # (IN, OUT) = (K, N)
    if (kp, np_) != (input_size, output_size):
        wt = jnp.pad(wt, ((0, kp - input_size), (0, np_ - output_size)))

    return {
        "wt": wt,
        "input_size": input_size,
        "output_size": output_size,
        "compute_dtype": jnp.dtype(compute_dtype),
        "tk": tk,
        "tn": tn,
        "Kp": kp,
        "Np": np_,
    }


def slp_forward(x, params, *, out_dtype=None, tm_cap=1024):
    """y = x @ W.T (bias-free linear).  `params` comes from prepare_weight()."""
    B, IN = x.shape
    assert IN == params["input_size"], "x feature dim must match weight inner dim"
    out_dtype = jnp.dtype(out_dtype or x.dtype)

    compute_dtype = params["compute_dtype"]
    tk, tn, Kp, Np = params["tk"], params["tn"], params["Kp"], params["Np"]
    OUT = params["output_size"]
    wt = params["wt"]

    # Batch tiling: span the whole padded batch when it fits so every weight tile
    # is streamed from HBM exactly once.
    sub = _sublane(compute_dtype)
    Bp = _round_up(B, sub)
    tm = Bp if Bp <= tm_cap else tm_cap
    Mp = _round_up(Bp, tm)

    x_c = x.astype(compute_dtype)
    if (Mp, Kp) != (B, IN):
        x_c = jnp.pad(x_c, ((0, Mp - B), (0, Kp - IN)))

    grid = (Mp // tm, Np // tn, Kp // tk)

    # Explicit VMEM budget: double-buffered x / W / out tiles (+ f32 acc if used).
    in_b = compute_dtype.itemsize
    out_b = out_dtype.itemsize
    use_scratch = out_dtype != jnp.dtype(jnp.float32)
    footprint = 2 * (tm * tk * in_b + tk * tn * in_b + tm * tn * out_b)
    if use_scratch:
        footprint += tm * tn * 4
    vmem_limit = int(min(max(2 * footprint, 32 << 20), 56 << 20))

    cost = pl.CostEstimate(
        flops=2 * Mp * Np * Kp,
        transcendentals=0,
        bytes_accessed=Mp * Kp * in_b + (Mp // tm) * Kp * Np * in_b + Mp * Np * out_b,
    )

    common = dict(
        out_shape=jax.ShapeDtypeStruct((Mp, Np), out_dtype),
        grid=grid,
        in_specs=[
            pl.BlockSpec((tm, tk), lambda i, j, k: (i, k)),  # x tile   (M, K)
            pl.BlockSpec((tk, tn), lambda i, j, k: (k, j)),  # W.T tile (K, N)
        ],
        out_specs=pl.BlockSpec((tm, tn), lambda i, j, k: (i, j)),
        compiler_params=pltpu.CompilerParams(
            dimension_semantics=("parallel", "parallel", "arbitrary"),
            vmem_limit_bytes=vmem_limit,
        ),
        cost_estimate=cost,
    )

    if use_scratch:
        out_p = pl.pallas_call(
            slp_kernel_scratch,
            scratch_shapes=[pltpu.VMEM((tm, tn), jnp.float32)],
            **common,
        )(x_c, wt)
    else:
        out_p = pl.pallas_call(slp_kernel_f32out, **common)(x_c, wt)

    # Strip zero padding back to the logical shape.
    return out_p[:B, :OUT]


if __name__ == "__main__":
    key = jax.random.PRNGKey(0)
    k_x, k_w = jax.random.split(key)

    # Small shapes consistent with the module's forward: a batch of feature
    # vectors through a bias-free linear layer.
    batch, input_size, output_size = 8, 64, 16

    x = jax.random.normal(k_x, (batch, input_size), dtype=jnp.float32)
    # nn.init.normal_(self.fc.weight, 0.0, 1.0) -> standard normal weights.
    weight = jax.random.normal(k_w, (output_size, input_size), dtype=jnp.float32)

    # --- default path: bf16 operands, f32 accumulation / output -------------
    params_bf16 = prepare_weight(weight, compute_dtype=jnp.bfloat16)  # once, at init
    y = slp_forward(x, params_bf16)
    jax.block_until_ready(y)
    assert y.shape == (batch, output_size)

    # Reference with matching (bf16 operand, f32 acc) numerics.
    y_ref_bf16 = jnp.dot(
        x.astype(jnp.bfloat16),
        weight.T.astype(jnp.bfloat16),
        preferred_element_type=jnp.float32,
    )
    assert jnp.allclose(y, y_ref_bf16, atol=1e-3, rtol=1e-3)
    # Loose sanity check against the exact f32 reference (bf16 quantization error).
    y_ref_f32 = x @ weight.T
    assert jnp.allclose(y, y_ref_f32, atol=5e-2, rtol=5e-2)

    # --- full-precision path: exact match against the f32 reference ---------
    params_f32 = prepare_weight(weight, compute_dtype=jnp.float32)
    y32 = slp_forward(x, params_f32)
    jax.block_until_ready(y32)
    assert jnp.allclose(y32, y_ref_f32, atol=1e-5, rtol=1e-5)

    print("KERNEL_OK")
</pallas_src>

<mosaic_0001>
module attributes {stable_mosaic.version = 11 : i64} {
  func.func @slp_kernel_f32out(%arg0: i32, %arg1: i32, %arg2: i32, %arg3: memref<16x128xbf16, #tpu.memory_space<vmem>>, %arg4: memref<128x128xbf16, #tpu.memory_space<vmem>>, %arg5: memref<16x128xf32, #tpu.memory_space<vmem>>) attributes {dimension_semantics = [#tpu.dimension_semantics<parallel>, #tpu.dimension_semantics<parallel>, #tpu.dimension_semantics<arbitrary>], iteration_bounds = array<i64: 1, 1, 1>, scalar_prefetch = 0 : i64, scratch_operands = 0 : i64, tpu.core_type = #tpu.core_type<tc>, window_params = [{transform_indices = @transform_0, window_bounds = array<i64: 16, 128>}, {transform_indices = @transform_1, window_bounds = array<i64: 128, 128>}, {transform_indices = @transform_2, window_bounds = array<i64: 16, 128>}]} {
    %c0 = arith.constant 0 : index
    %c0_0 = arith.constant 0 : index
    %0 = vector.load %arg3[%c0, %c0_0] : memref<16x128xbf16, #tpu.memory_space<vmem>>, vector<16x128xbf16>
    %c0_1 = arith.constant 0 : index
    %c0_2 = arith.constant 0 : index
    %1 = vector.load %arg4[%c0_1, %c0_2] : memref<128x128xbf16, #tpu.memory_space<vmem>>, vector<128x128xbf16>
    %cst = arith.constant dense<0.000000e+00> : vector<16x128xf32>
    %2 = tpu.matmul %0, %1, %cst {dimension_numbers = #tpu.dot_dimension_numbers<[1], [0], [0], [1], [0, 0, 1, 1], [], []>} : vector<16x128xbf16>, vector<128x128xbf16>, vector<16x128xf32> -> vector<16x128xf32>
    %c0_i32 = arith.constant 0 : i32
    %3 = arith.cmpi eq, %arg2, %c0_i32 : i32
    %4 = arith.extui %3 : i1 to i32
    %c0_i32_3 = arith.constant 0 : i32
    %5 = arith.cmpi ne, %4, %c0_i32_3 : i32
    scf.if %5 {
      %c0_6 = arith.constant 0 : index
      %c0_7 = arith.constant 0 : index
      %9 = vector.load %arg5[%c0_6, %c0_7] : memref<16x128xf32, #tpu.memory_space<vmem>>, vector<16x128xf32>
      tpu.vector_store %arg5[%c0_6, %c0_7], %2 {strides = array<i32>} : memref<16x128xf32, #tpu.memory_space<vmem>>, vector<16x128xf32>,
    } else {
    }
    %c0_i32_4 = arith.constant 0 : i32
    %6 = arith.cmpi sgt, %arg2, %c0_i32_4 : i32
    %7 = arith.extui %6 : i1 to i32
    %c0_i32_5 = arith.constant 0 : i32
    %8 = arith.cmpi ne, %7, %c0_i32_5 : i32
    scf.if %8 {
      %c0_6 = arith.constant 0 : index
      %c0_7 = arith.constant 0 : index
      %9 = vector.load %arg5[%c0_6, %c0_7] : memref<16x128xf32, #tpu.memory_space<vmem>>, vector<16x128xf32>
      %10 = arith.addf %9, %2 : vector<16x128xf32>
      %c0_8 = arith.constant 0 : index
      %c0_9 = arith.constant 0 : index
      %11 = vector.load %arg5[%c0_8, %c0_9] : memref<16x128xf32, #tpu.memory_space<vmem>>, vector<16x128xf32>
      tpu.vector_store %arg5[%c0_8, %c0_9], %10 {strides = array<i32>} : memref<16x128xf32, #tpu.memory_space<vmem>>, vector<16x128xf32>,
    } else {
    }
    return
  }
  func.func @transform_0(%arg0: i32, %arg1: i32, %arg2: i32) -> (i32, i32) {
    %c0_i32 = arith.constant 0 : i32
    return %arg0, %arg2 : i32, i32
  }
  func.func @transform_1(%arg0: i32, %arg1: i32, %arg2: i32) -> (i32, i32) {
    %c0_i32 = arith.constant 0 : i32
    return %arg2, %arg1 : i32, i32
  }
  func.func @transform_2(%arg0: i32, %arg1: i32, %arg2: i32) -> (i32, i32) {
    %c0_i32 = arith.constant 0 : i32
    return %arg0, %arg1 : i32, i32
  }
}

</mosaic_0001>

<llo_original>
// kernel: tpu_custom_call.1
$region0: #{tpu_custom_call.1}
  #allocation0 [shape = 'u32[]', space=smem, size = 0x4, offset = 0x4, fixed_abs, tag = 'smem constant byte address 0x4 - core index']
  #allocation1 [shape = 'u32[144,128]{1,0:T(1,128)}', space=vmem, size = 0x12000, scoped, tag = 'internal scratch']
  %s0 = inlined_call_operand.hbm [shape: bf16[16,128], index: 0, kind: input, shape index: {}]
  %s1 = inlined_call_operand.hbm [shape: bf16[128,128], index: 1, kind: input, shape index: {}]
  %s2 = inlined_call_operand.hbm [shape: f32[16,128], index: 2, kind: output, shape index: {}]
  %s3 = sld [smem:[#allocation0]]
  $region34: #{tpu_custom_call.1} parent=0
    _
  %s5 = ssub.s32 1, %s3
  %s6 = scalar_select 0, %s5, %s3
  $region1: #{tpu_custom_call.1} parent=0
    #allocation2 [shape = 'u8[4096]{0}', space=vmem, size = 0x1000, scoped, tag = 'input window, operand 0, single buffered']
    #allocation3 [shape = 's32[1]{0}', space=sflag, size = 0x4, scoped, tag = 'scoped memory for tpu_custom_call.1']
    #allocation4 [shape = 's32[1]{0}', space=sflag, size = 0x4, scoped, tag = 'scoped memory for tpu_custom_call.1']
    #allocation5 [shape = 'u8[32768]{0}', space=vmem, size = 0x8000, scoped, tag = 'input window, operand 1, single buffered']
    #allocation6 [shape = 's32[1]{0}', space=sflag, size = 0x4, scoped, tag = 'scoped memory for tpu_custom_call.1']
    #allocation7 [shape = 'u8[8192]{0}', space=vmem, size = 0x2000, scoped, tag = 'output window, operand 0, single buffered']
    %7 = vsyncpa [#allocation3], 0
    %8 = vsyncpa [#allocation6], 0
    %9 = vsyncpa [#allocation4], 0
    // Predicated region
    $region2: #{tpu_custom_call.1} parent=1 // pred_check
      _
    $region3: #{tpu_custom_call.1} parent=1 // pred_check_branch
      %11 = sbr.rel (0) target = $region5
    $region4: #{tpu_custom_call.1} parent=1 // pred_region
      %s13 = ssub.s32 128, 128
      %14 = vsyncadd [#allocation3], %s13
      %s15 = sshll.u32 [#allocation2], 4
      %s16 = int_to_ptr.vmem [resolvable:$true] %s15
      %21 = dma.hbm_to_vmem [thread:$0]  %s0, 128, %s16, [#allocation3], 64, 64, 4
    $region5: #{tpu_custom_call.1} parent=1 // pred_fallthru
      _
    // Predicated region
    $region6: #{tpu_custom_call.1} parent=1 // pred_check
      _
    $region7: #{tpu_custom_call.1} parent=1 // pred_check_branch
      %23 = sbr.rel (0) target = $region9
    $region8: #{tpu_custom_call.1} parent=1 // pred_region
      %s25 = ssub.s32 1024, 1024
      %26 = vsyncadd [#allocation6], %s25
      %s27 = sshll.u32 [#allocation5], 4
      %s28 = int_to_ptr.vmem [resolvable:$true] %s27
      %33 = dma.hbm_to_vmem [thread:$0]  %s1, 1024, %s28, [#allocation6], 64, 64, 4
    $region9: #{tpu_custom_call.1} parent=1 // pred_fallthru
      _
    // Predicated region
    $region10: #{tpu_custom_call.1} parent=1 // pred_check
      _
    $region11: #{tpu_custom_call.1} parent=1 // pred_check_branch
      %35 = sbr.rel (0) target = $region13
    $region12: #{tpu_custom_call.1} parent=1 // pred_region
      %36 = dma.done [#allocation3], 128
    $region13: #{tpu_custom_call.1} parent=1 // pred_fallthru
      _
    // Predicated region
    $region14: #{tpu_custom_call.1} parent=1 // pred_check
      _
    $region15: #{tpu_custom_call.1} parent=1 // pred_check_branch
      %38 = sbr.rel (0) target = $region17
    $region16: #{tpu_custom_call.1} parent=1 // pred_region
      %39 = dma.done [#allocation6], 1024
    $region17: #{tpu_custom_call.1} parent=1 // pred_fallthru
      _
    %v41 = vld [vmem:[#allocation2] sm:$0xf]
    %v42 = vld [vmem:[#allocation2 + $0x4] sm:$0xf]
    %v43 = vld [vmem:[#allocation5] sm:$0xf]
    %v44 = vld [vmem:[#allocation5 + $0x4] sm:$0xf]
    %v45 = vld [vmem:[#allocation5 + $0x8] sm:$0xf]
    %v46 = vld [vmem:[#allocation5 + $0xc] sm:$0xf]
    %v47 = vld [vmem:[#allocation5 + $0x10] sm:$0xf]
    %v48 = vld [vmem:[#allocation5 + $0x14] sm:$0xf]
    %v49 = vld [vmem:[#allocation5 + $0x18] sm:$0xf]
    %v50 = vld [vmem:[#allocation5 + $0x1c] sm:$0xf]
    %v51 = vld [vmem:[#allocation5 + $0x20] sm:$0xf]
    %v52 = vld [vmem:[#allocation5 + $0x24] sm:$0xf]
    %v53 = vld [vmem:[#allocation5 + $0x28] sm:$0xf]
    %v54 = vld [vmem:[#allocation5 + $0x2c] sm:$0xf]
    %v55 = vld [vmem:[#allocation5 + $0x30] sm:$0xf]
    %v56 = vld [vmem:[#allocation5 + $0x34] sm:$0xf]
    %v57 = vld [vmem:[#allocation5 + $0x38] sm:$0xf]
    %v58 = vld [vmem:[#allocation5 + $0x3c] sm:$0xf]
    %v61 = vunpack.c.l.b16 %v41
    %v62 = vunpack.c.l.b16 %v42
    %v63 = vpack.c.b16 %v62, %v61
    %v81 = vunpack.c.l.b16 %v43
    %v82 = vunpack.c.l.b16 %v44
    %v83 = vunpack.c.l.b16 %v45
    %v84 = vunpack.c.l.b16 %v46
    %v85 = vunpack.c.l.b16 %v47
    %v86 = vunpack.c.l.b16 %v48
    %v87 = vunpack.c.l.b16 %v49
    %v88 = vunpack.c.l.b16 %v50
    %v89 = vunpack.c.l.b16 %v51
    %v90 = vunpack.c.l.b16 %v52
    %v91 = vunpack.c.l.b16 %v53
    %v92 = vunpack.c.l.b16 %v54
    %v93 = vunpack.c.l.b16 %v55
    %v94 = vunpack.c.l.b16 %v56
    %v95 = vunpack.c.l.b16 %v57
    %v96 = vunpack.c.l.b16 %v58
    %v97 = vpack.c.b16 %v82, %v81
    %v98 = vpack.c.b16 %v84, %v83
    %v99 = vpack.c.b16 %v86, %v85
    %v100 = vpack.c.b16 %v88, %v87
    %v101 = vpack.c.b16 %v90, %v89
    %v102 = vpack.c.b16 %v92, %v91
    %v103 = vpack.c.b16 %v94, %v93
    %v104 = vpack.c.b16 %v96, %v95
    %113 = vmatprep.subr.bf16.mxu0 0
    %114 = vmatpush1.bf16.msra.mxu0 %v104
    %115 = vmatprep.subr.bf16.mxu0 0
    %116 = vmatpush1.bf16.msra.mxu0 %v103
    %117 = vmatprep.subr.bf16.mxu0 0
    %118 = vmatpush1.bf16.msra.mxu0 %v102
    %119 = vmatprep.subr.bf16.mxu0 0
    %120 = vmatpush1.bf16.msra.mxu0 %v101
    %121 = vmatprep.subr.bf16.mxu0 0
    %122 = vmatpush1.bf16.msra.mxu0 %v100
    %123 = vmatprep.subr.bf16.mxu0 0
    %124 = vmatpush1.bf16.msra.mxu0 %v99
    %125 = vmatprep.subr.bf16.mxu0 0
    %126 = vmatpush1.bf16.msra.mxu0 %v98
    %127 = vmatprep.subr.bf16.mxu0 0
    %128 = vmatpush1.bf16.msra.mxu0 %v97
    %129 = vmatprep.subr.bf16.mxu0 0
    %130 = vmatpush2.bf16.msra.mxu0 0
    %131 = vmatprep.subr.bf16.mxu0 0
    %132 = vmatpush2.bf16.msra.mxu0 0
    %133 = vmatprep.subr.bf16.mxu0 0
    %134 = vmatpush2.bf16.msra.mxu0 0
    %135 = vmatprep.subr.bf16.mxu0 0
    %136 = vmatpush2.bf16.msra.mxu0 0
    %137 = vmatprep.subr.bf16.mxu0 0
    %138 = vmatpush2.bf16.msra.mxu0 0
    %139 = vmatprep.subr.bf16.mxu0 0
    %140 = vmatpush2.bf16.msra.mxu0 0
    %141 = vmatprep.subr.bf16.mxu0 0
    %142 = vmatpush2.bf16.msra.mxu0 0
    %143 = vmatprep.subr.bf16.mxu0 0
    %144 = vmatpush2.bf16.msra.mxu0 0
    %145 = vmatprep.mubr.bf16.mxu0 0
    %146 = vmatmul.mubr.bf16.gmra.mxu0 %v63
    %v147 = vpop.f32.mrf.mxu0
    %v148 = vadd.f32 0.0, %v147
    %v149 = vpop.f32.mrf.mxu0
    %v150 = vpop.f32.mrf.mxu0
    %v151 = vadd.f32 0.0, %v150
    %v152 = vpop.f32.mrf.mxu0
    %153 = vdwg.mxu0
    %p154 = scmp.eq.s32.totalorder 0, 0
    // Predicated region
    $region18: #{tpu_custom_call.1} parent=1 // pred_check
      %p155 = pneg %p154
    $region19: #{tpu_custom_call.1} parent=1 // pred_check_branch
      %157 = sbr.rel (%p155) target = $region21
    $region20: #{tpu_custom_call.1} parent=1 // pred_region
      %158 = vst [vmem:[#allocation7] sm:$0xff] %v148
      %159 = vst [vmem:[#allocation7 + $0x8] sm:$0xff] %v151
    $region21: #{tpu_custom_call.1} parent=1 // pred_fallthru
      _
    %p160 = scmp.gt.s32.totalorder 0, 0
    // Predicated region
    $region22: #{tpu_custom_call.1} parent=1 // pred_check
      %p161 = pneg %p160
    $region23: #{tpu_custom_call.1} parent=1 // pred_check_branch
      %163 = sbr.rel (%p161) target = $region25
    $region24: #{tpu_custom_call.1} parent=1 // pred_region
      %v164 = vld [vmem:[#allocation7] sm:$0xff]
      %v165 = vld [vmem:[#allocation7 + $0x8] sm:$0xff]
      %v166 = vadd.f32 %v164, %v148
      %v167 = vadd.f32 %v165, %v151
      %168 = vst [vmem:[#allocation7] sm:$0xff] %v166
      %169 = vst [vmem:[#allocation7 + $0x8] sm:$0xff] %v167
    $region25: #{tpu_custom_call.1} parent=1 // pred_fallthru
      _
    // Predicated region
    $region26: #{tpu_custom_call.1} parent=1 // pred_check
      _
    $region27: #{tpu_custom_call.1} parent=1 // pred_check_branch
      %171 = sbr.rel (0) target = $region29
    $region28: #{tpu_custom_call.1} parent=1 // pred_region
      %s173 = ssub.s32 256, 256
      %174 = vsyncadd [#allocation4], %s173
      %s175 = sshll.u32 [#allocation7], 4
      %s176 = int_to_ptr.vmem [resolvable:$true] %s175
      %181 = dma.vmem_to_hbm [thread:$0]  %s176, 256, %s2, [#allocation4], 128, 128, 8
    $region29: #{tpu_custom_call.1} parent=1 // pred_fallthru
      _
    // Predicated region
    $region30: #{tpu_custom_call.1} parent=1 // pred_check
      _
    $region31: #{tpu_custom_call.1} parent=1 // pred_check_branch
      %183 = sbr.rel (0) target = $region33
    $region32: #{tpu_custom_call.1} parent=1 // pred_region
      %184 = dma.done [#allocation4], 256
    $region33: #{tpu_custom_call.1} parent=1 // pred_fallthru
      _
    %185 = vsyncpa [#allocation3], 1
    %186 = vsyncpa [#allocation6], 1
    %187 = vsyncpa [#allocation4], 1

</llo_original>
